<compile_context>
chip_gen: v5e
topology: v5e:2x2
jax: 0.10.0
libtpu: 0.0.40
codegen_flags: <defaults>
</compile_context>

<pallas_src>
import jax
import jax.numpy as jnp
from jax.experimental import pallas as pl
from jax.experimental.pallas import tpu as pltpu

HIDDEN_PAD = 128  # both hidden layers (64, 32) zero-padded to one full 128-lane width


def _round_up(v, m):
    return (v + m - 1) // m * m


def simplenet_kernel(x_ref, w1_ref, b1_ref, w2_ref, b2_ref, w3_ref, b3_ref, o_ref):
    # x_ref:  (input_size, TB) bf16  -- batch on the lane (N) axis
    # w1_ref: (128, input_size) bf16, w2_ref: (128, 128) bf16, w3_ref: (1, 128) bf16
    # b1_ref/b2_ref: (128, 1) f32 columns, b3_ref: (1,) f32 scalar in SMEM
    # fc1 + ReLU: (128, in) @ (in, TB) -> (128, TB), f32 accumulate, bias/ReLU in f32.
    h1 = jnp.dot(w1_ref[...], x_ref[...], preferred_element_type=jnp.float32) + b1_ref[...]
    h1 = jnp.maximum(h1, 0.0).astype(jnp.bfloat16)
    # fc2 + ReLU: (128, 128) @ (128, TB) -> (128, TB)
    h2 = jnp.dot(w2_ref[...], h1, preferred_element_type=jnp.float32) + b2_ref[...]
    h2 = jnp.maximum(h2, 0.0).astype(jnp.bfloat16)
    # fc3: (1, 128) @ (128, TB) -> (1, TB) lane-dense output row.
    o = jnp.dot(w3_ref[...], h2, preferred_element_type=jnp.float32)
    o_ref[...] = (o + b3_ref[0]).astype(o_ref.dtype)


def _pad2d(a, shape):
    return jnp.pad(a, [(0, t - s) for s, t in zip(a.shape, shape)])


def prepare_params(params):
    """One-time weight prep (torch layout in, kernel layout out): pad hidden dims to 128,
    cast MXU operands to bf16, keep biases in f32. Call once at init, not per forward."""
    input_size = params["w1"].shape[1]
    return {
        "w1": _pad2d(params["w1"].astype(jnp.float32), (HIDDEN_PAD, input_size)).astype(jnp.bfloat16),
        "b1": _pad2d(params["b1"].astype(jnp.float32).reshape(-1, 1), (HIDDEN_PAD, 1)),
        "w2": _pad2d(params["w2"].astype(jnp.float32), (HIDDEN_PAD, HIDDEN_PAD)).astype(jnp.bfloat16),
        "b2": _pad2d(params["b2"].astype(jnp.float32).reshape(-1, 1), (HIDDEN_PAD, 1)),
        "w3": _pad2d(params["w3"].astype(jnp.float32), (1, HIDDEN_PAD)).astype(jnp.bfloat16),
        "b3": params["b3"].astype(jnp.float32).reshape(1),  # SMEM scalar
    }


def simplenet_forward(x, prepared, *, block_rows=2048):
    """x: (B, input_size) f32. prepared: output of prepare_params()."""
    B, input_size = x.shape
    block_rows = _round_up(max(block_rows, 128), 128)
    # Adaptive tile: ensure >= 2 grid blocks when possible so both v7x TensorCores get work.
    tb = max(128, min(block_rows, _round_up(pl.cdiv(B, 2), 128)))
    num_blocks = pl.cdiv(B, tb)

    # One small wrapper op: lane-dense, bf16 x in (input_size, B) layout. Ragged last grid block
    # is safe: each output column depends only on its own input column; OOB writes are masked.
    x_t = x.T.astype(jnp.bfloat16)

    out = pl.pallas_call(
        simplenet_kernel,
        out_shape=jax.ShapeDtypeStruct((1, B), jnp.float32),
        grid=(num_blocks,),
        in_specs=[
            pl.BlockSpec((input_size, tb), lambda i: (0, i)),           # x: tiled over batch lanes
            pl.BlockSpec((HIDDEN_PAD, input_size), lambda i: (0, 0)),   # weights/biases resident
            pl.BlockSpec((HIDDEN_PAD, 1), lambda i: (0, 0)),
            pl.BlockSpec((HIDDEN_PAD, HIDDEN_PAD), lambda i: (0, 0)),
            pl.BlockSpec((HIDDEN_PAD, 1), lambda i: (0, 0)),
            pl.BlockSpec((1, HIDDEN_PAD), lambda i: (0, 0)),
            pl.BlockSpec(memory_space=pltpu.MemorySpace.SMEM),          # b3 scalar
        ],
        out_specs=pl.BlockSpec((1, tb), lambda i: (0, i)),              # lane-dense output row
        compiler_params=pltpu.CompilerParams(
            dimension_semantics=("parallel",),          # shard batch tiles across TCs
            vmem_limit_bytes=32 * 1024 * 1024,          # ample for TB<=8192; under v7x 64 MiB/TC
        ),
    )(x_t, prepared["w1"], prepared["b1"], prepared["w2"], prepared["b2"],
      prepared["w3"], prepared["b3"])

    return out.reshape(B, 1)


def init_params(key, input_size):
    """Deterministic init matching torch nn.Linear shapes/layout (weight = (out, in))."""
    k1, k2, k3, k4, k5, k6 = jax.random.split(key, 6)

    def uniform(k, shape, fan_in):
        bound = 1.0 / jnp.sqrt(fan_in)
        return jax.random.uniform(k, shape, jnp.float32, -bound, bound)

    return {
        "w1": uniform(k1, (64, input_size), input_size),
        "b1": uniform(k2, (64,), input_size),
        "w2": uniform(k3, (32, 64), 64),
        "b2": uniform(k4, (32,), 64),
        "w3": uniform(k5, (1, 32), 32),
        "b3": uniform(k6, (1,), 32),
    }


def reference_forward(x, p):
    h1 = jnp.maximum(x @ p["w1"].T + p["b1"], 0.0)
    h2 = jnp.maximum(h1 @ p["w2"].T + p["b2"], 0.0)
    return h2 @ p["w3"].T + p["b3"]


if __name__ == "__main__":
    key = jax.random.PRNGKey(0)
    kx, kp = jax.random.split(key)

    batch, input_size = 200, 16  # not a tile multiple: exercises ragged last block + 2-step grid
    x = jax.random.normal(kx, (batch, input_size), dtype=jnp.float32)
    params = init_params(kp, input_size)
    prepared = prepare_params(params)  # one-time weight padding / bf16 cast

    out = simplenet_forward(x, prepared)
    out = jax.block_until_ready(out)

    ref = reference_forward(x, params)
    assert out.shape == (batch, 1), out.shape
    max_err = float(jnp.max(jnp.abs(out - ref)))
    # bf16 MXU inputs with f32 accumulation: loosened tolerance vs. the pure-f32 path.
    assert jnp.allclose(out, ref, atol=5e-2, rtol=5e-2), f"mismatch vs reference (max abs err {max_err})"

    print("KERNEL_OK")
</pallas_src>

<mosaic_0001>
module attributes {stable_mosaic.version = 11 : i64} {
  func.func @simplenet_kernel(%arg0: i32, %arg1: memref<16x128xbf16, #tpu.memory_space<vmem>>, %arg2: memref<128x16xbf16, #tpu.memory_space<vmem>>, %arg3: memref<128x1xf32, #tpu.memory_space<vmem>>, %arg4: memref<128x128xbf16, #tpu.memory_space<vmem>>, %arg5: memref<128x1xf32, #tpu.memory_space<vmem>>, %arg6: memref<1x128xbf16, #tpu.memory_space<vmem>>, %arg7: memref<1xf32, #tpu.memory_space<smem>>, %arg8: memref<1x128xf32, #tpu.memory_space<vmem>>) attributes {dimension_semantics = [#tpu.dimension_semantics<parallel>], iteration_bounds = array<i64: 2>, scalar_prefetch = 0 : i64, scratch_operands = 0 : i64, tpu.core_type = #tpu.core_type<tc>, window_params = [{transform_indices = @transform_0, window_bounds = array<i64: 16, 128>}, {pipeline_mode = #tpu.pipeline_mode<synchronous>, transform_indices = @transform_1, window_bounds = array<i64: 128, 16>}, {pipeline_mode = #tpu.pipeline_mode<synchronous>, transform_indices = @transform_2, window_bounds = array<i64: 128, 1>}, {pipeline_mode = #tpu.pipeline_mode<synchronous>, transform_indices = @transform_3, window_bounds = array<i64: 128, 128>}, {pipeline_mode = #tpu.pipeline_mode<synchronous>, transform_indices = @transform_4, window_bounds = array<i64: 128, 1>}, {pipeline_mode = #tpu.pipeline_mode<synchronous>, transform_indices = @transform_5, window_bounds = array<i64: 1, 128>}, {transform_indices = @transform_6, window_bounds = array<i64: 1>}, {transform_indices = @transform_7, window_bounds = array<i64: 1, 128>}]} {
    %c0 = arith.constant 0 : index
    %c0_0 = arith.constant 0 : index
    %0 = vector.load %arg2[%c0, %c0_0] : memref<128x16xbf16, #tpu.memory_space<vmem>>, vector<128x16xbf16>
    %c0_1 = arith.constant 0 : index
    %c0_2 = arith.constant 0 : index
    %1 = vector.load %arg1[%c0_1, %c0_2] : memref<16x128xbf16, #tpu.memory_space<vmem>>, vector<16x128xbf16>
    %cst = arith.constant dense<0.000000e+00> : vector<128x128xf32>
    %2 = tpu.matmul %0, %1, %cst {dimension_numbers = #tpu.dot_dimension_numbers<[1], [0], [0], [1], [0, 0, 1, 1], [], []>} : vector<128x16xbf16>, vector<16x128xbf16>, vector<128x128xf32> -> vector<128x128xf32>
    %c0_3 = arith.constant 0 : index
    %c0_4 = arith.constant 0 : index
    %3 = vector.load %arg3[%c0_3, %c0_4] : memref<128x1xf32, #tpu.memory_space<vmem>>, vector<128x1xf32>
    %4 = vector.broadcast %3 : vector<128x1xf32> to vector<128x128xf32>
    %5 = arith.addf %2, %4 : vector<128x128xf32>
    %cst_5 = arith.constant 0.000000e+00 : f32
    %6 = vector.broadcast %cst_5 : f32 to vector<128x128xf32>
    %7 = arith.maximumf %5, %6 : vector<128x128xf32>
    %8 = arith.truncf %7 : vector<128x128xf32> to vector<128x128xbf16>
    %c0_6 = arith.constant 0 : index
    %c0_7 = arith.constant 0 : index
    %9 = vector.load %arg4[%c0_6, %c0_7] : memref<128x128xbf16, #tpu.memory_space<vmem>>, vector<128x128xbf16>
    %cst_8 = arith.constant dense<0.000000e+00> : vector<128x128xf32>
    %10 = tpu.matmul %9, %8, %cst_8 {dimension_numbers = #tpu.dot_dimension_numbers<[1], [0], [0], [1], [0, 0, 1, 1], [], []>} : vector<128x128xbf16>, vector<128x128xbf16>, vector<128x128xf32> -> vector<128x128xf32>
    %c0_9 = arith.constant 0 : index
    %c0_10 = arith.constant 0 : index
    %11 = vector.load %arg5[%c0_9, %c0_10] : memref<128x1xf32, #tpu.memory_space<vmem>>, vector<128x1xf32>
    %12 = vector.broadcast %11 : vector<128x1xf32> to vector<128x128xf32>
    %13 = arith.addf %10, %12 : vector<128x128xf32>
    %cst_11 = arith.constant 0.000000e+00 : f32
    %14 = vector.broadcast %cst_11 : f32 to vector<128x128xf32>
    %15 = arith.maximumf %13, %14 : vector<128x128xf32>
    %16 = arith.truncf %15 : vector<128x128xf32> to vector<128x128xbf16>
    %c0_12 = arith.constant 0 : index
    %c0_13 = arith.constant 0 : index
    %17 = vector.load %arg6[%c0_12, %c0_13] : memref<1x128xbf16, #tpu.memory_space<vmem>>, vector<1x128xbf16>
    %cst_14 = arith.constant dense<0.000000e+00> : vector<1x128xf32>
    %18 = tpu.matmul %17, %16, %cst_14 {dimension_numbers = #tpu.dot_dimension_numbers<[1], [0], [0], [1], [0, 0, 1, 1], [], []>} : vector<1x128xbf16>, vector<128x128xbf16>, vector<1x128xf32> -> vector<1x128xf32>
    %c0_15 = arith.constant 0 : index
    %19 = memref.load %arg7[%c0_15] : memref<1xf32, #tpu.memory_space<smem>>
    %20 = vector.broadcast %19 : f32 to vector<1x128xf32>
    %21 = arith.addf %18, %20 : vector<1x128xf32>
    %c0_16 = arith.constant 0 : index
    %c0_17 = arith.constant 0 : index
    %22 = vector.load %arg8[%c0_16, %c0_17] : memref<1x128xf32, #tpu.memory_space<vmem>>, vector<1x128xf32>
    tpu.vector_store %arg8[%c0_16, %c0_17], %21 {strides = array<i32>} : memref<1x128xf32, #tpu.memory_space<vmem>>, vector<1x128xf32>,
    return
  }
  func.func @transform_0(%arg0: i32) -> (i32, i32) {
    %c0_i32 = arith.constant 0 : i32
    %c0_i32_0 = arith.constant 0 : i32
    return %c0_i32, %arg0 : i32, i32
  }
  func.func @transform_1(%arg0: i32) -> (i32, i32) {
    %c0_i32 = arith.constant 0 : i32
    %c0_i32_0 = arith.constant 0 : i32
    %c0_i32_1 = arith.constant 0 : i32
    return %c0_i32, %c0_i32_0 : i32, i32
  }
  func.func @transform_2(%arg0: i32) -> (i32, i32) {
    %c0_i32 = arith.constant 0 : i32
    %c0_i32_0 = arith.constant 0 : i32
    %c0_i32_1 = arith.constant 0 : i32
    return %c0_i32, %c0_i32_0 : i32, i32
  }
  func.func @transform_3(%arg0: i32) -> (i32, i32) {
    %c0_i32 = arith.constant 0 : i32
    %c0_i32_0 = arith.constant 0 : i32
    %c0_i32_1 = arith.constant 0 : i32
    return %c0_i32, %c0_i32_0 : i32, i32
  }
  func.func @transform_4(%arg0: i32) -> (i32, i32) {
    %c0_i32 = arith.constant 0 : i32
    %c0_i32_0 = arith.constant 0 : i32
    %c0_i32_1 = arith.constant 0 : i32
    return %c0_i32, %c0_i32_0 : i32, i32
  }
  func.func @transform_5(%arg0: i32) -> (i32, i32) {
    %c0_i32 = arith.constant 0 : i32
    %c0_i32_0 = arith.constant 0 : i32
    %c0_i32_1 = arith.constant 0 : i32
    return %c0_i32, %c0_i32_0 : i32, i32
  }
  func.func @transform_6(%arg0: i32) -> i32 {
    %c0_i32 = arith.constant 0 : i32
    %c0_i32_0 = arith.constant 0 : i32
    return %c0_i32 : i32
  }
  func.func @transform_7(%arg0: i32) -> (i32, i32) {
    %c0_i32 = arith.constant 0 : i32
    %c0_i32_0 = arith.constant 0 : i32
    return %c0_i32, %arg0 : i32, i32
  }
}

</mosaic_0001>

<llo_original>
// kernel: tpu_custom_call.1
$region0: #{tpu_custom_call.1}
  #allocation0 [shape = 'u32[]', space=smem, size = 0x4, offset = 0x4, fixed_abs, tag = 'smem constant byte address 0x4 - core index']
  #allocation1 [shape = 'u32[72,128]{1,0:T(1,128)}', space=vmem, size = 0x9000, scoped, tag = 'internal scratch']
  #allocation2 [shape = 'f32[1]{0:T(128)S(6)}', space=smem, size = 0x200, scoped, tag = 'scoped memory for tpu_custom_call.1']
  %s0 = inlined_call_operand.vmem [shape: bf16[16,200], index: 0, kind: input, shape index: {}]
  %s1 = inlined_call_operand.vmem [shape: bf16[128,16], index: 1, kind: input, shape index: {}]
  %s2 = inlined_call_operand.vmem [shape: f32[128,1], index: 2, kind: input, shape index: {}]
  %s3 = inlined_call_operand.vmem [shape: bf16[128,128], index: 3, kind: input, shape index: {}]
  %s4 = inlined_call_operand.vmem [shape: f32[128,1], index: 4, kind: input, shape index: {}]
  %s5 = inlined_call_operand.vmem [shape: bf16[1,128], index: 5, kind: input, shape index: {}]
  %s6 = inlined_call_operand.<no memory space> [shape: f32[1], index: 6, kind: input, shape index: {}]
  %s7 = inlined_call_operand.hbm [shape: f32[1,200], index: 7, kind: output, shape index: {}]
  %s8 = sld [smem:[#allocation0]]
  $region102: #{tpu_custom_call.1} parent=0
    _
  %s10 = ssub.s32 1, %s8
  %s11 = scalar_select 0, %s10, %s8
  %12 = sst [smem:[#allocation2]] %s6
  $region1: #{tpu_custom_call.1} parent=0
    #allocation3 [shape = 'u8[8192]{0}', space=vmem, size = 0x2000, scoped, tag = 'input window, operand 0']
    #allocation4 [shape = 'u8[1024]{0}', space=vmem, size = 0x400, scoped, tag = 'output window, operand 0']
    #allocation5 [shape = 's32[2]{0}', space=sflag, size = 0x8, scoped, tag = 'scoped memory for tpu_custom_call.1']
    %13 = vsyncpa [#allocation5], 0
    %s14 = scalar_lea.sflag [#allocation5], 1
    %15 = vsyncpa %s14, 0
    loop: start=0, step=1, limit=4
    $region2: #{tpu_custom_call.1} parent=1 // loop_pre_header
      _
    $region3: #{tpu_custom_call.1} parent=1 // loop_header
      %s17 = sphi 0, %s21
      %p18 = scmp.ge.s32.totalorder %s17, 4
      %s27 = sphi 0, %s29
      %s30 = sphi 0, %s27
      %s31 = sphi 0, %s30
      %s47 = sphi 0, %s31
      %s51 = sphi 0, %s51
      %s53 = sphi 0, %s51
      %s54 = sphi 0, %s53
      %s68 = sphi 0, %s54
      %s72 = sphi 0, %s72
      %s74 = sphi 0, %s72
      %s75 = sphi 0, %s74
      %s89 = sphi 0, %s75
      %s93 = sphi 0, %s93
      %s95 = sphi 0, %s93
      %s96 = sphi 0, %s95
      %s110 = sphi 0, %s96
      %s114 = sphi 0, %s114
      %s116 = sphi 0, %s114
      %s117 = sphi 0, %s116
      %s131 = sphi 0, %s117
      %s135 = sphi 0, %s135
      %s137 = sphi 0, %s135
      %s138 = sphi 0, %s137
      %s152 = sphi 0, %s138
      %s156 = sphi 0, %s156
      %s158 = sphi 0, %s156
      %s159 = sphi 0, %s158
      %s173 = sphi 0, %s159
      %s179 = sphi 0, %s181
      %s182 = sphi 0, %s179
      %s183 = sphi 0, %s182
      %s199 = sphi 0, %s183
    $region4: #{tpu_custom_call.1} parent=1 // loop_header_branch
      %20 = sbr.rel (%p18) target = $region8
    $region5: #{tpu_custom_call.1} parent=1 // loop_body
      %s22 = ssub.s32 %s17, 1
      %s23 = ssub.s32 %s17, 2
      %s24 = sadd.s32 %s17, 1
      %s25 = ssub.s32 %s17, %s24
      %p26 = scmp.eq.s32.totalorder %s25, 0
      %s28 = sadd.s32 %s27, 1
      %s29 = scalar_select %p26, %s27, %s28
      %p32 = pneg %p26
      %p33 = scmp.eq.s32.totalorder %s17, 1
      %p34 = por %p32, %p33
      %p35 = scmp.ne.s32.totalorder %s27, %s30
      %p36 = scmp.eq.s32.totalorder %s17, 0
      %p37 = por %p35, %p36
      %p38 = scmp.ne.s32.totalorder %s27, %s30
      %p39 = scmp.eq.s32.totalorder %s22, 1
      %p40 = por %p38, %p39
      %p41 = scmp.ne.s32.totalorder %s30, %s31
      %p42 = scmp.eq.s32.totalorder %s22, 0
      %p43 = por %p41, %p42
      %p44 = scmp.ne.s32.totalorder %s30, %s31
      %p45 = scmp.eq.s32.totalorder %s23, 1
      %p46 = por %p44, %p45
      %p48 = scmp.ne.s32.totalorder %s31, %s47
      %p49 = scmp.eq.s32.totalorder %s23, 0
      %p50 = por %p48, %p49
      %s52 = sadd.s32 %s51, 1
      %p55 = scmp.eq.s32.totalorder %s17, 1
      %p56 = scmp.ne.s32.totalorder %s51, %s53
      %p57 = scmp.eq.s32.totalorder %s17, 0
      %p58 = por %p56, %p57
      %p59 = scmp.ne.s32.totalorder %s51, %s53
      %p60 = scmp.eq.s32.totalorder %s22, 1
      %p61 = por %p59, %p60
      %p62 = scmp.ne.s32.totalorder %s53, %s54
      %p63 = scmp.eq.s32.totalorder %s22, 0
      %p64 = por %p62, %p63
      %p65 = scmp.ne.s32.totalorder %s53, %s54
      %p66 = scmp.eq.s32.totalorder %s23, 1
      %p67 = por %p65, %p66
      %p69 = scmp.ne.s32.totalorder %s54, %s68
      %p70 = scmp.eq.s32.totalorder %s23, 0
      %p71 = por %p69, %p70
      %s73 = sadd.s32 %s72, 1
      %p76 = scmp.eq.s32.totalorder %s17, 1
      %p77 = scmp.ne.s32.totalorder %s72, %s74
      %p78 = scmp.eq.s32.totalorder %s17, 0
      %p79 = por %p77, %p78
      %p80 = scmp.ne.s32.totalorder %s72, %s74
      %p81 = scmp.eq.s32.totalorder %s22, 1
      %p82 = por %p80, %p81
      %p83 = scmp.ne.s32.totalorder %s74, %s75
      %p84 = scmp.eq.s32.totalorder %s22, 0
      %p85 = por %p83, %p84
      %p86 = scmp.ne.s32.totalorder %s74, %s75
      %p87 = scmp.eq.s32.totalorder %s23, 1
      %p88 = por %p86, %p87
      %p90 = scmp.ne.s32.totalorder %s75, %s89
      %p91 = scmp.eq.s32.totalorder %s23, 0
      %p92 = por %p90, %p91
      %s94 = sadd.s32 %s93, 1
      %p97 = scmp.eq.s32.totalorder %s17, 1
      %p98 = scmp.ne.s32.totalorder %s93, %s95
      %p99 = scmp.eq.s32.totalorder %s17, 0
      %p100 = por %p98, %p99
      %p101 = scmp.ne.s32.totalorder %s93, %s95
      %p102 = scmp.eq.s32.totalorder %s22, 1
      %p103 = por %p101, %p102
      %p104 = scmp.ne.s32.totalorder %s95, %s96
      %p105 = scmp.eq.s32.totalorder %s22, 0
      %p106 = por %p104, %p105
      %p107 = scmp.ne.s32.totalorder %s95, %s96
      %p108 = scmp.eq.s32.totalorder %s23, 1
      %p109 = por %p107, %p108
      %p111 = scmp.ne.s32.totalorder %s96, %s110
      %p112 = scmp.eq.s32.totalorder %s23, 0
      %p113 = por %p111, %p112
      %s115 = sadd.s32 %s114, 1
      %p118 = scmp.eq.s32.totalorder %s17, 1
      %p119 = scmp.ne.s32.totalorder %s114, %s116
      %p120 = scmp.eq.s32.totalorder %s17, 0
      %p121 = por %p119, %p120
      %p122 = scmp.ne.s32.totalorder %s114, %s116
      %p123 = scmp.eq.s32.totalorder %s22, 1
      %p124 = por %p122, %p123
      %p125 = scmp.ne.s32.totalorder %s116, %s117
      %p126 = scmp.eq.s32.totalorder %s22, 0
      %p127 = por %p125, %p126
      %p128 = scmp.ne.s32.totalorder %s116, %s117
      %p129 = scmp.eq.s32.totalorder %s23, 1
      %p130 = por %p128, %p129
      %p132 = scmp.ne.s32.totalorder %s117, %s131
      %p133 = scmp.eq.s32.totalorder %s23, 0
      %p134 = por %p132, %p133
      %s136 = sadd.s32 %s135, 1
      %p139 = scmp.eq.s32.totalorder %s17, 1
      %p140 = scmp.ne.s32.totalorder %s135, %s137
      %p141 = scmp.eq.s32.totalorder %s17, 0
      %p142 = por %p140, %p141
      %p143 = scmp.ne.s32.totalorder %s135, %s137
      %p144 = scmp.eq.s32.totalorder %s22, 1
      %p145 = por %p143, %p144
      %p146 = scmp.ne.s32.totalorder %s137, %s138
      %p147 = scmp.eq.s32.totalorder %s22, 0
      %p148 = por %p146, %p147
      %p149 = scmp.ne.s32.totalorder %s137, %s138
      %p150 = scmp.eq.s32.totalorder %s23, 1
      %p151 = por %p149, %p150
      %p153 = scmp.ne.s32.totalorder %s138, %s152
      %p154 = scmp.eq.s32.totalorder %s23, 0
      %p155 = por %p153, %p154
      %s157 = sadd.s32 %s156, 1
      %p160 = scmp.eq.s32.totalorder %s17, 1
      %p161 = scmp.ne.s32.totalorder %s156, %s158
      %p162 = scmp.eq.s32.totalorder %s17, 0
      %p163 = por %p161, %p162
      %p164 = scmp.ne.s32.totalorder %s156, %s158
      %p165 = scmp.eq.s32.totalorder %s22, 1
      %p166 = por %p164, %p165
      %p167 = scmp.ne.s32.totalorder %s158, %s159
      %p168 = scmp.eq.s32.totalorder %s22, 0
      %p169 = por %p167, %p168
      %p170 = scmp.ne.s32.totalorder %s158, %s159
      %p171 = scmp.eq.s32.totalorder %s23, 1
      %p172 = por %p170, %p171
      %p174 = scmp.ne.s32.totalorder %s159, %s173
      %p175 = scmp.eq.s32.totalorder %s23, 0
      %p176 = por %p174, %p175
      %s177 = ssub.s32 %s17, %s24
      %p178 = scmp.eq.s32.totalorder %s177, 0
      %s180 = sadd.s32 %s179, 1
      %s181 = scalar_select %p178, %s179, %s180
      %p184 = pneg %p178
      %p185 = scmp.eq.s32.totalorder %s17, 1
      %p186 = por %p184, %p185
      %p187 = scmp.ne.s32.totalorder %s179, %s182
      %p188 = scmp.eq.s32.totalorder %s17, 0
      %p189 = por %p187, %p188
      %p190 = scmp.ne.s32.totalorder %s179, %s182
      %p191 = scmp.eq.s32.totalorder %s22, 1
      %p192 = por %p190, %p191
      %p193 = scmp.ne.s32.totalorder %s182, %s183
      %p194 = scmp.eq.s32.totalorder %s22, 0
      %p195 = por %p193, %p194
      %p196 = scmp.ne.s32.totalorder %s182, %s183
      %p197 = scmp.eq.s32.totalorder %s23, 1
      %p198 = por %p196, %p197
      %p200 = scmp.ne.s32.totalorder %s183, %s199
      %p201 = scmp.eq.s32.totalorder %s23, 0
      %p202 = por %p200, %p201
      %p203 = scmp.le.s32.totalorder 1, %s17
      %p204 = scmp.lt.s32.totalorder %s17, 3
      %p205 = pnand %p203, %p204
      %p206 = pneg %p205
      // Predicated region
      $region9: #{tpu_custom_call.1} parent=5 // pred_check
        _
      $region10: #{tpu_custom_call.1} parent=5 // pred_check_branch
        %208 = sbr.rel (%p205) target = $region12
      $region11: #{tpu_custom_call.1} parent=5 // pred_region
        %s209 = ssub.s32 %s17, 1
        // Predicated region
        $region13: #{tpu_custom_call.1} parent=11 // pred_check
          %p210 = pneg %p64
        $region14: #{tpu_custom_call.1} parent=11 // pred_check_branch
          %212 = sbr.rel (%p210) target = $region16
        $region15: #{tpu_custom_call.1} parent=11 // pred_region
          _
        $region16: #{tpu_custom_call.1} parent=11 // pred_fallthru
          _
        // Predicated region
        $region17: #{tpu_custom_call.1} parent=11 // pred_check
          %p213 = pneg %p85
        $region18: #{tpu_custom_call.1} parent=11 // pred_check_branch
          %215 = sbr.rel (%p213) target = $region20
        $region19: #{tpu_custom_call.1} parent=11 // pred_region
          _
        $region20: #{tpu_custom_call.1} parent=11 // pred_fallthru
          _
        // Predicated region
        $region21: #{tpu_custom_call.1} parent=11 // pred_check
          %p216 = pneg %p106
        $region22: #{tpu_custom_call.1} parent=11 // pred_check_branch
          %218 = sbr.rel (%p216) target = $region24
        $region23: #{tpu_custom_call.1} parent=11 // pred_region
          _
        $region24: #{tpu_custom_call.1} parent=11 // pred_fallthru
          _
        // Predicated region
        $region25: #{tpu_custom_call.1} parent=11 // pred_check
          %p219 = pneg %p127
        $region26: #{tpu_custom_call.1} parent=11 // pred_check_branch
          %221 = sbr.rel (%p219) target = $region28
        $region27: #{tpu_custom_call.1} parent=11 // pred_region
          _
        $region28: #{tpu_custom_call.1} parent=11 // pred_fallthru
          _
        // Predicated region
        $region29: #{tpu_custom_call.1} parent=11 // pred_check
          %p222 = pneg %p148
        $region30: #{tpu_custom_call.1} parent=11 // pred_check_branch
          %224 = sbr.rel (%p222) target = $region32
        $region31: #{tpu_custom_call.1} parent=11 // pred_region
          _
        $region32: #{tpu_custom_call.1} parent=11 // pred_fallthru
          _
        // Predicated region
        $region33: #{tpu_custom_call.1} parent=11 // pred_check
          %p225 = pneg %p169
        $region34: #{tpu_custom_call.1} parent=11 // pred_check_branch
          %227 = sbr.rel (%p225) target = $region36
        $region35: #{tpu_custom_call.1} parent=11 // pred_region
          _
        $region36: #{tpu_custom_call.1} parent=11 // pred_fallthru
          _
      $region12: #{tpu_custom_call.1} parent=5 // pred_fallthru
        _
      %p228 = scmp.lt.s32.totalorder %s17, 2
      // Predicated region
      $region37: #{tpu_custom_call.1} parent=5 // pred_check
        %p229 = pneg %p228
      $region38: #{tpu_custom_call.1} parent=5 // pred_check_branch
        %231 = sbr.rel (%p229) target = $region40
      $region39: #{tpu_custom_call.1} parent=5 // pred_region
        // Predicated region
        $region41: #{tpu_custom_call.1} parent=39 // pred_check
          %p232 = pneg %p37
        $region42: #{tpu_custom_call.1} parent=39 // pred_check_branch
          %234 = sbr.rel (%p232) target = $region44
        $region43: #{tpu_custom_call.1} parent=39 // pred_region
          %s235 = sand.u32 %s27, 1
          %s236 = sand.u32 %s27, 1
          %s237 = smul.addr %s236, 8
          %s238 = scalar_lea.vmem [#allocation3], %s237
          %s239 = smul.addr %s17, 4
          %s240 = scalar_lea.vmem %s0, %s239
          // Predicated region
          $region45: #{tpu_custom_call.1} parent=43 // pred_check
            _
          $region46: #{tpu_custom_call.1} parent=43 // pred_check_branch
            %242 = sbr.rel (0) target = $region48
          $region47: #{tpu_custom_call.1} parent=43 // pred_region
            // Predicated region
            $region49: #{tpu_custom_call.1} parent=47 // pred_check
              _
            $region50: #{tpu_custom_call.1} parent=47 // pred_check_branch
              %244 = sbr.rel target = $region52
            $region51: #{tpu_custom_call.1} parent=47 // pred_region
              // Predicated region
              $region64: #{tpu_custom_call.1} parent=51 // pred_check
                _
              $region65: #{tpu_custom_call.1} parent=51 // pred_check_branch
                %262 = sbr.rel (0) target = $region67
              $region66: #{tpu_custom_call.1} parent=51 // pred_region
                loop: start=0, step=1, limit=1
                $region68: #{tpu_custom_call.1} parent=66 // loop_pre_header
                  _
                $region69: #{tpu_custom_call.1} parent=66 // loop_header
                  %s264 = sphi 0, %s268
                  %p265 = scmp.ge.s32.totalorder %s264, 1
                  %s269 = sphi %s240, %s240
                  %s270 = sphi %s238, %s238
                $region70: #{tpu_custom_call.1} parent=66 // loop_header_branch
                  %267 = sbr.rel (%p265) target = $region74
                $region71: #{tpu_custom_call.1} parent=66 // loop_body
                  _
                $region72: #{tpu_custom_call.1} parent=66 // loop_footer
                  %s268 = sadd.s32 1, %s264
                $region73: #{tpu_custom_call.1} parent=66 // loop_footer_branch
                  %263 = sbr.rel target = $region69
                $region74: #{tpu_custom_call.1} parent=66 // loop_exit
                  _
                %s272 = ssub.s32 16, 1
                loop: start=0, step=1, limit=1
                $region75: #{tpu_custom_call.1} parent=66 // loop_pre_header
                  _
                $region76: #{tpu_custom_call.1} parent=66 // loop_header
                  %s274 = sphi 0, %s278
                  %p275 = scmp.ge.s32.totalorder %s274, 1
                  %s279 = sphi %s240, %s240
                  %s280 = sphi %s238, %s238
                $region77: #{tpu_custom_call.1} parent=66 // loop_header_branch
                  %277 = sbr.rel (%p275) target = $region81
                $region78: #{tpu_custom_call.1} parent=66 // loop_body
                  %v281 = vld [vmem:[%s279] sm:%s272]
                  %282 = vst [vmem:[%s280] sm:%s272] %v281
                  %v283 = vld [vmem:[%s279 + $0x8] sm:%s272]
                  %284 = vst [vmem:[%s280 + $0x4] sm:%s272] %v283
                $region79: #{tpu_custom_call.1} parent=66 // loop_footer
                  %s278 = sadd.s32 1, %s274
                $region80: #{tpu_custom_call.1} parent=66 // loop_footer_branch
                  %273 = sbr.rel target = $region76
                $region81: #{tpu_custom_call.1} parent=66 // loop_exit
                  _
              $region67: #{tpu_custom_call.1} parent=51 // pred_fallthru
                _
            $region52: #{tpu_custom_call.1} parent=47 // pred_fallthru
              _
            // Predicated region
            $region53: #{tpu_custom_call.1} parent=47 // pred_check
              _
            $region54: #{tpu_custom_call.1} parent=47 // pred_check_branch
              %246 = sbr.rel (0) target = $region56
            $region55: #{tpu_custom_call.1} parent=47 // pred_region
              %s248 = ssub.s32 16, 1
              loop: start=0, step=1, limit=1
              $region57: #{tpu_custom_call.1} parent=55 // loop_pre_header
                _
              $region58: #{tpu_custom_call.1} parent=55 // loop_header
                %s250 = sphi 0, %s254
                %p251 = scmp.ge.s32.totalorder %s250, 1
                %s255 = sphi %s240, %s240
                %s256 = sphi %s238, %s238
              $region59: #{tpu_custom_call.1} parent=55 // loop_header_branch
                %253 = sbr.rel (%p251) target = $region63
              $region60: #{tpu_custom_call.1} parent=55 // loop_body
                %v257 = vld [vmem:[%s255] sm:%s248]
                %258 = vst [vmem:[%s256] sm:%s248] %v257
                %v259 = vld [vmem:[%s255 + $0x8] sm:%s248]
                %260 = vst [vmem:[%s256 + $0x4] sm:%s248] %v259
              $region61: #{tpu_custom_call.1} parent=55 // loop_footer
                %s254 = sadd.s32 1, %s250
              $region62: #{tpu_custom_call.1} parent=55 // loop_footer_branch
                %249 = sbr.rel target = $region58
              $region63: #{tpu_custom_call.1} parent=55 // loop_exit
                _
            $region56: #{tpu_custom_call.1} parent=47 // pred_fallthru
              _
          $region48: #{tpu_custom_call.1} parent=43 // pred_fallthru
            _
          %285 = vnop
        $region44: #{tpu_custom_call.1} parent=39 // pred_fallthru
          _
      $region40: #{tpu_custom_call.1} parent=5 // pred_fallthru
        _
      %p286 = scmp.le.s32.totalorder 1, %s17
      %p287 = scmp.lt.s32.totalorder %s17, 3
      %p288 = pnand %p286, %p287
      %p289 = pneg %p288
      // Predicated region
      $region82: #{tpu_custom_call.1} parent=5 // pred_check
        _
      $region83: #{tpu_custom_call.1} parent=5 // pred_check_branch
        %291 = sbr.rel (%p288) target = $region85
      $region84: #{tpu_custom_call.1} parent=5 // pred_region
        %s292 = ssub.s32 %s17, 1
        %s293 = sand.u32 %s30, 1
        %s294 = sand.u32 %s30, 1
        %s295 = smul.addr %s294, 8
        %s296 = scalar_lea.vmem [#allocation3], %s295
        // Predicated region
        $region86: #{tpu_custom_call.1} parent=84 // pred_check
          %p297 = pneg %p43
        $region87: #{tpu_custom_call.1} parent=84 // pred_check_branch
          %299 = sbr.rel (%p297) target = $region89
        $region88: #{tpu_custom_call.1} parent=84 // pred_region
          _
        $region89: #{tpu_custom_call.1} parent=84 // pred_fallthru
          _
        %s300 = sand.u32 %s30, 1
        %s301 = sand.u32 %s30, 1
        %s302 = smul.addr %s301, 8
        %s303 = scalar_lea.vmem [#allocation3], %s302
        %p304 = pneg %p43
        %p305 = pneg %p40
        %p306 = pneg %p64
        %p307 = pneg %p61
        %p308 = pneg %p85
        %p309 = pneg %p82
        %p310 = pneg %p106
        %p311 = pneg %p103
        %p312 = pneg %p127
        %p313 = pneg %p124
        %p314 = pneg %p148
        %p315 = pneg %p145
        %p316 = pneg %p169
        %p317 = pneg %p166
        %p318 = pneg %p195
        %p319 = pneg %p192
        %s320 = sand.u32 %s182, 1
        %s321 = scalar_lea.sflag [#allocation5], %s320
        %s322 = sand.u32 %s182, 1
        %s323 = scalar_lea.vmem [#allocation4], %s322
        %v325 = vld [vmem:[%s1] sm:$0xf]
        %v326 = vld [vmem:[%s1 + $0x4] sm:$0xf]
        %v327 = vld [vmem:[%s1 + $0x8] sm:$0xf]
        %v328 = vld [vmem:[%s1 + $0xc] sm:$0xf]
        %v329 = vld [vmem:[%s1 + $0x10] sm:$0xf]
        %v330 = vld [vmem:[%s1 + $0x14] sm:$0xf]
        %v331 = vld [vmem:[%s1 + $0x18] sm:$0xf]
        %v332 = vld [vmem:[%s1 + $0x1c] sm:$0xf]
        %v333 = vld [vmem:[%s1 + $0x20] sm:$0xf]
        %v334 = vld [vmem:[%s1 + $0x24] sm:$0xf]
        %v335 = vld [vmem:[%s1 + $0x28] sm:$0xf]
        %v336 = vld [vmem:[%s1 + $0x2c] sm:$0xf]
        %v337 = vld [vmem:[%s1 + $0x30] sm:$0xf]
        %v338 = vld [vmem:[%s1 + $0x34] sm:$0xf]
        %v339 = vld [vmem:[%s1 + $0x38] sm:$0xf]
        %v340 = vld [vmem:[%s1 + $0x3c] sm:$0xf]
        %v341 = vld [vmem:[%s296] sm:$0xf]
        %v342 = vld [vmem:[%s296 + $0x4] sm:$0xf]
        %v343 = vld [vmem:[%s2] sm:$0xff]
        %v344 = vld [vmem:[%s2 + $0x8] sm:$0xff]
        %v345 = vld [vmem:[%s2 + $0x10] sm:$0xff]
        %v346 = vld [vmem:[%s2 + $0x18] sm:$0xff]
        %v347 = vld [vmem:[%s2 + $0x20] sm:$0xff]
        %v348 = vld [vmem:[%s2 + $0x28] sm:$0xff]
        %v349 = vld [vmem:[%s2 + $0x30] sm:$0xff]
        %v350 = vld [vmem:[%s2 + $0x38] sm:$0xff]
        %v351 = vld [vmem:[%s2 + $0x40] sm:$0xff]
        %v352 = vld [vmem:[%s2 + $0x48] sm:$0xff]
        %v353 = vld [vmem:[%s2 + $0x50] sm:$0xff]
        %v354 = vld [vmem:[%s2 + $0x58] sm:$0xff]
        %v355 = vld [vmem:[%s2 + $0x60] sm:$0xff]
        %v356 = vld [vmem:[%s2 + $0x68] sm:$0xff]
        %v357 = vld [vmem:[%s2 + $0x70] sm:$0xff]
        %v358 = vld [vmem:[%s2 + $0x78] sm:$0xff]
        %360 = vset.pattern.permute.xlu0 0
        %361 = vperm.xlu0 %360, %v343
        %v362 = vpop.permute.xlu0 %361
        %365 = vset.pattern.permute.xlu0 0
        %366 = vperm.xlu0 %365, %v344
        %v367 = vpop.permute.xlu0 %366
        %370 = vset.pattern.permute.xlu0 0
        %371 = vperm.xlu0 %370, %v345
        %v372 = vpop.permute.xlu0 %371
        %375 = vset.pattern.permute.xlu0 0
        %376 = vperm.xlu0 %375, %v346
        %v377 = vpop.permute.xlu0 %376
        %380 = vset.pattern.permute.xlu0 0
        %381 = vperm.xlu0 %380, %v347
        %v382 = vpop.permute.xlu0 %381
        %385 = vset.pattern.permute.xlu0 0
        %386 = vperm.xlu0 %385, %v348
        %v387 = vpop.permute.xlu0 %386
        %390 = vset.pattern.permute.xlu0 0
        %391 = vperm.xlu0 %390, %v349
        %v392 = vpop.permute.xlu0 %391
        %395 = vset.pattern.permute.xlu0 0
        %396 = vperm.xlu0 %395, %v350
        %v397 = vpop.permute.xlu0 %396
        %400 = vset.pattern.permute.xlu0 0
        %401 = vperm.xlu0 %400, %v351
        %v402 = vpop.permute.xlu0 %401
        %405 = vset.pattern.permute.xlu0 0
        %406 = vperm.xlu0 %405, %v352
        %v407 = vpop.permute.xlu0 %406
        %410 = vset.pattern.permute.xlu0 0
        %411 = vperm.xlu0 %410, %v353
        %v412 = vpop.permute.xlu0 %411
        %415 = vset.pattern.permute.xlu0 0
        %416 = vperm.xlu0 %415, %v354
        %v417 = vpop.permute.xlu0 %416
        %420 = vset.pattern.permute.xlu0 0
        %421 = vperm.xlu0 %420, %v355
        %v422 = vpop.permute.xlu0 %421
        %425 = vset.pattern.permute.xlu0 0
        %426 = vperm.xlu0 %425, %v356
        %v427 = vpop.permute.xlu0 %426
        %430 = vset.pattern.permute.xlu0 0
        %431 = vperm.xlu0 %430, %v357
        %v432 = vpop.permute.xlu0 %431
        %435 = vset.pattern.permute.xlu0 0
        %436 = vperm.xlu0 %435, %v358
        %v437 = vpop.permute.xlu0 %436
        %v455 = vunpack.c.l.b16 %v325
        %v456 = vunpack.c.l.b16 %v326
        %v457 = vunpack.c.l.b16 %v327
        %v458 = vunpack.c.l.b16 %v328
        %v459 = vunpack.c.l.b16 %v329
        %v460 = vunpack.c.l.b16 %v330
        %v461 = vunpack.c.l.b16 %v331
        %v462 = vunpack.c.l.b16 %v332
        %v463 = vunpack.c.l.b16 %v333
        %v464 = vunpack.c.l.b16 %v334
        %v465 = vunpack.c.l.b16 %v335
        %v466 = vunpack.c.l.b16 %v336
        %v467 = vunpack.c.l.b16 %v337
        %v468 = vunpack.c.l.b16 %v338
        %v469 = vunpack.c.l.b16 %v339
        %v470 = vunpack.c.l.b16 %v340
        %v471 = vpack.c.b16 %v456, %v455
        %v472 = vpack.c.b16 %v458, %v457
        %v473 = vpack.c.b16 %v460, %v459
        %v474 = vpack.c.b16 %v462, %v461
        %v475 = vpack.c.b16 %v464, %v463
        %v476 = vpack.c.b16 %v466, %v465
        %v477 = vpack.c.b16 %v468, %v467
        %v478 = vpack.c.b16 %v470, %v469
        %v481 = vunpack.c.l.b16 %v341
        %v482 = vunpack.c.l.b16 %v342
        %v483 = vpack.c.b16 %v482, %v481
        %vm485 = vcmask 130048
        %v487 = vsel %vm485, %v471, 0
        %v490 = vsel %vm485, %v472, 0
        %v493 = vsel %vm485, %v473, 0
        %v496 = vsel %vm485, %v474, 0
        %v499 = vsel %vm485, %v475, 0
        %v502 = vsel %vm485, %v476, 0
        %v505 = vsel %vm485, %v477, 0
        %v508 = vsel %vm485, %v478, 0
        %510 = vmatpush.bf16.msra.mxu0 0
        %511 = vmatpush.bf16.msra.mxu0 0
        %512 = vmatpush.bf16.msra.mxu0 0
        %513 = vmatpush.bf16.msra.mxu0 0
        %514 = vmatpush.bf16.msra.mxu0 0
        %515 = vmatpush.bf16.msra.mxu0 0
        %516 = vmatpush.bf16.msra.mxu0 0
        %517 = vmatpush.bf16.msra.mxu0 %v483
        %518 = vmatmul.bf16.gmra.mxu0 %v487
        %v519 = vpop.f32.mrf.mxu0
        %v520 = vadd.f32 %v362, %v519
        %v521 = vpop.f32.mrf.mxu0
        %v522 = vadd.f32 %v367, %v521
        %523 = vmatmul.bf16.gmra.mxu0 %v490
        %v524 = vpop.f32.mrf.mxu0
        %v525 = vadd.f32 %v372, %v524
        %v526 = vpop.f32.mrf.mxu0
        %v527 = vadd.f32 %v377, %v526
        %528 = vmatmul.bf16.gmra.mxu0 %v493
        %v529 = vpop.f32.mrf.mxu0
        %v530 = vadd.f32 %v382, %v529
        %v531 = vpop.f32.mrf.mxu0
        %v532 = vadd.f32 %v387, %v531
        %533 = vmatmul.bf16.gmra.mxu0 %v496
        %v534 = vpop.f32.mrf.mxu0
        %v535 = vadd.f32 %v392, %v534
        %v536 = vpop.f32.mrf.mxu0
        %v537 = vadd.f32 %v397, %v536
        %538 = vmatmul.bf16.gmra.mxu0 %v499
        %v539 = vpop.f32.mrf.mxu0
        %v540 = vadd.f32 %v402, %v539
        %v541 = vpop.f32.mrf.mxu0
        %v542 = vadd.f32 %v407, %v541
        %543 = vmatmul.bf16.gmra.mxu0 %v502
        %v544 = vpop.f32.mrf.mxu0
        %v545 = vadd.f32 %v412, %v544
        %v546 = vpop.f32.mrf.mxu0
        %v547 = vadd.f32 %v417, %v546
        %548 = vmatmul.bf16.gmra.mxu0 %v505
        %v549 = vpop.f32.mrf.mxu0
        %v550 = vadd.f32 %v422, %v549
        %v551 = vpop.f32.mrf.mxu0
        %v552 = vadd.f32 %v427, %v551
        %553 = vmatmul.bf16.gmra.mxu0 %v508
        %v554 = vpop.f32.mrf.mxu0
        %v555 = vadd.f32 %v432, %v554
        %v556 = vpop.f32.mrf.mxu0
        %v557 = vadd.f32 %v437, %v556
        %558 = vdwg.mxu0
        %v559 = vmax.f32 %v520, 0.0
        %v560 = vmax.f32 %v522, 0.0
        %v561 = vmax.f32 %v525, 0.0
        %v562 = vmax.f32 %v527, 0.0
        %v563 = vmax.f32 %v530, 0.0
        %v564 = vmax.f32 %v532, 0.0
        %v565 = vmax.f32 %v535, 0.0
        %v566 = vmax.f32 %v537, 0.0
        %v567 = vmax.f32 %v540, 0.0
        %v568 = vmax.f32 %v542, 0.0
        %v569 = vmax.f32 %v545, 0.0
        %v570 = vmax.f32 %v547, 0.0
        %v571 = vmax.f32 %v550, 0.0
        %v572 = vmax.f32 %v552, 0.0
        %v573 = vmax.f32 %v555, 0.0
        %v574 = vmax.f32 %v557, 0.0
        %v575 = vpack.c.bf16 %v560, %v559
        %v576 = vpack.c.bf16 %v562, %v561
        %v577 = vpack.c.bf16 %v564, %v563
        %v578 = vpack.c.bf16 %v566, %v565
        %v579 = vpack.c.bf16 %v568, %v567
        %v580 = vpack.c.bf16 %v570, %v569
        %v581 = vpack.c.bf16 %v572, %v571
        %v582 = vpack.c.bf16 %v574, %v573
        %v583 = vld [vmem:[%s3] sm:$0xf]
        %v584 = vld [vmem:[%s3 + $0x4] sm:$0xf]
        %v585 = vld [vmem:[%s3 + $0x8] sm:$0xf]
        %v586 = vld [vmem:[%s3 + $0xc] sm:$0xf]
        %v587 = vld [vmem:[%s3 + $0x10] sm:$0xf]
        %v588 = vld [vmem:[%s3 + $0x14] sm:$0xf]
        %v589 = vld [vmem:[%s3 + $0x18] sm:$0xf]
        %v590 = vld [vmem:[%s3 + $0x1c] sm:$0xf]
        %v591 = vld [vmem:[%s3 + $0x20] sm:$0xf]
        %v592 = vld [vmem:[%s3 + $0x24] sm:$0xf]
        %v593 = vld [vmem:[%s3 + $0x28] sm:$0xf]
        %v594 = vld [vmem:[%s3 + $0x2c] sm:$0xf]
        %v595 = vld [vmem:[%s3 + $0x30] sm:$0xf]
        %v596 = vld [vmem:[%s3 + $0x34] sm:$0xf]
        %v597 = vld [vmem:[%s3 + $0x38] sm:$0xf]
        %v598 = vld [vmem:[%s3 + $0x3c] sm:$0xf]
        %v599 = vld [vmem:[%s4] sm:$0xff]
        %v600 = vld [vmem:[%s4 + $0x8] sm:$0xff]
        %v601 = vld [vmem:[%s4 + $0x10] sm:$0xff]
        %v602 = vld [vmem:[%s4 + $0x18] sm:$0xff]
        %v603 = vld [vmem:[%s4 + $0x20] sm:$0xff]
        %v604 = vld [vmem:[%s4 + $0x28] sm:$0xff]
        %v605 = vld [vmem:[%s4 + $0x30] sm:$0xff]
        %v606 = vld [vmem:[%s4 + $0x38] sm:$0xff]
        %v607 = vld [vmem:[%s4 + $0x40] sm:$0xff]
        %v608 = vld [vmem:[%s4 + $0x48] sm:$0xff]
        %v609 = vld [vmem:[%s4 + $0x50] sm:$0xff]
        %v610 = vld [vmem:[%s4 + $0x58] sm:$0xff]
        %v611 = vld [vmem:[%s4 + $0x60] sm:$0xff]
        %v612 = vld [vmem:[%s4 + $0x68] sm:$0xff]
        %v613 = vld [vmem:[%s4 + $0x70] sm:$0xff]
        %v614 = vld [vmem:[%s4 + $0x78] sm:$0xff]
        %616 = vset.pattern.permute.xlu0 0
        %617 = vperm.xlu0 %616, %v599
        %v618 = vpop.permute.xlu0 %617
        %621 = vset.pattern.permute.xlu0 0
        %622 = vperm.xlu0 %621, %v600
        %v623 = vpop.permute.xlu0 %622
        %626 = vset.pattern.permute.xlu0 0
        %627 = vperm.xlu0 %626, %v601
        %v628 = vpop.permute.xlu0 %627
        %631 = vset.pattern.permute.xlu0 0
        %632 = vperm.xlu0 %631, %v602
        %v633 = vpop.permute.xlu0 %632
        %636 = vset.pattern.permute.xlu0 0
        %637 = vperm.xlu0 %636, %v603
        %v638 = vpop.permute.xlu0 %637
        %641 = vset.pattern.permute.xlu0 0
        %642 = vperm.xlu0 %641, %v604
        %v643 = vpop.permute.xlu0 %642
        %646 = vset.pattern.permute.xlu0 0
        %647 = vperm.xlu0 %646, %v605
        %v648 = vpop.permute.xlu0 %647
        %651 = vset.pattern.permute.xlu0 0
        %652 = vperm.xlu0 %651, %v606
        %v653 = vpop.permute.xlu0 %652
        %656 = vset.pattern.permute.xlu0 0
        %657 = vperm.xlu0 %656, %v607
        %v658 = vpop.permute.xlu0 %657
        %661 = vset.pattern.permute.xlu0 0
        %662 = vperm.xlu0 %661, %v608
        %v663 = vpop.permute.xlu0 %662
        %666 = vset.pattern.permute.xlu0 0
        %667 = vperm.xlu0 %666, %v609
        %v668 = vpop.permute.xlu0 %667
        %671 = vset.pattern.permute.xlu0 0
        %672 = vperm.xlu0 %671, %v610
        %v673 = vpop.permute.xlu0 %672
        %676 = vset.pattern.permute.xlu0 0
        %677 = vperm.xlu0 %676, %v611
        %v678 = vpop.permute.xlu0 %677
        %681 = vset.pattern.permute.xlu0 0
        %682 = vperm.xlu0 %681, %v612
        %v683 = vpop.permute.xlu0 %682
        %686 = vset.pattern.permute.xlu0 0
        %687 = vperm.xlu0 %686, %v613
        %v688 = vpop.permute.xlu0 %687
        %691 = vset.pattern.permute.xlu0 0
        %692 = vperm.xlu0 %691, %v614
        %v693 = vpop.permute.xlu0 %692
        %v711 = vunpack.c.l.b16 %v583
        %v712 = vunpack.c.l.b16 %v584
        %v713 = vunpack.c.l.b16 %v585
        %v714 = vunpack.c.l.b16 %v586
        %v715 = vunpack.c.l.b16 %v587
        %v716 = vunpack.c.l.b16 %v588
        %v717 = vunpack.c.l.b16 %v589
        %v718 = vunpack.c.l.b16 %v590
        %v719 = vunpack.c.l.b16 %v591
        %v720 = vunpack.c.l.b16 %v592
        %v721 = vunpack.c.l.b16 %v593
        %v722 = vunpack.c.l.b16 %v594
        %v723 = vunpack.c.l.b16 %v595
        %v724 = vunpack.c.l.b16 %v596
        %v725 = vunpack.c.l.b16 %v597
        %v726 = vunpack.c.l.b16 %v598
        %v727 = vpack.c.b16 %v712, %v711
        %v728 = vpack.c.b16 %v714, %v713
        %v729 = vpack.c.b16 %v716, %v715
        %v730 = vpack.c.b16 %v718, %v717
        %v731 = vpack.c.b16 %v720, %v719
        %v732 = vpack.c.b16 %v722, %v721
        %v733 = vpack.c.b16 %v724, %v723
        %v734 = vpack.c.b16 %v726, %v725
        %743 = vmatpush.bf16.msra.mxu0 %v582
        %744 = vmatpush.bf16.msra.mxu0 %v581
        %745 = vmatpush.bf16.msra.mxu0 %v580
        %746 = vmatpush.bf16.msra.mxu0 %v579
        %747 = vmatpush.bf16.msra.mxu0 %v578
        %748 = vmatpush.bf16.msra.mxu0 %v577
        %749 = vmatpush.bf16.msra.mxu0 %v576
        %750 = vmatpush.bf16.msra.mxu0 %v575
        %751 = vmatmul.bf16.gmra.mxu0 %v727
        %v752 = vpop.f32.mrf.mxu0
        %v753 = vadd.f32 %v618, %v752
        %v754 = vpop.f32.mrf.mxu0
        %v755 = vadd.f32 %v623, %v754
        %756 = vmatmul.bf16.gmra.mxu0 %v728
        %v757 = vpop.f32.mrf.mxu0
        %v758 = vadd.f32 %v628, %v757
        %v759 = vpop.f32.mrf.mxu0
        %v760 = vadd.f32 %v633, %v759
        %761 = vmatmul.bf16.gmra.mxu0 %v729
        %v762 = vpop.f32.mrf.mxu0
        %v763 = vadd.f32 %v638, %v762
        %v764 = vpop.f32.mrf.mxu0
        %v765 = vadd.f32 %v643, %v764
        %766 = vmatmul.bf16.gmra.mxu0 %v730
        %v767 = vpop.f32.mrf.mxu0
        %v768 = vadd.f32 %v648, %v767
        %v769 = vpop.f32.mrf.mxu0
        %v770 = vadd.f32 %v653, %v769
        %771 = vmatmul.bf16.gmra.mxu0 %v731
        %v772 = vpop.f32.mrf.mxu0
        %v773 = vadd.f32 %v658, %v772
        %v774 = vpop.f32.mrf.mxu0
        %v775 = vadd.f32 %v663, %v774
        %776 = vmatmul.bf16.gmra.mxu0 %v732
        %v777 = vpop.f32.mrf.mxu0
        %v778 = vadd.f32 %v668, %v777
        %v779 = vpop.f32.mrf.mxu0
        %v780 = vadd.f32 %v673, %v779
        %781 = vmatmul.bf16.gmra.mxu0 %v733
        %v782 = vpop.f32.mrf.mxu0
        %v783 = vadd.f32 %v678, %v782
        %v784 = vpop.f32.mrf.mxu0
        %v785 = vadd.f32 %v683, %v784
        %786 = vmatmul.bf16.gmra.mxu0 %v734
        %v787 = vpop.f32.mrf.mxu0
        %v788 = vadd.f32 %v688, %v787
        %v789 = vpop.f32.mrf.mxu0
        %v790 = vadd.f32 %v693, %v789
        %791 = vdwg.mxu0
        %v792 = vmax.f32 %v753, 0.0
        %v793 = vmax.f32 %v755, 0.0
        %v794 = vmax.f32 %v758, 0.0
        %v795 = vmax.f32 %v760, 0.0
        %v796 = vmax.f32 %v763, 0.0
        %v797 = vmax.f32 %v765, 0.0
        %v798 = vmax.f32 %v768, 0.0
        %v799 = vmax.f32 %v770, 0.0
        %v800 = vmax.f32 %v773, 0.0
        %v801 = vmax.f32 %v775, 0.0
        %v802 = vmax.f32 %v778, 0.0
        %v803 = vmax.f32 %v780, 0.0
        %v804 = vmax.f32 %v783, 0.0
        %v805 = vmax.f32 %v785, 0.0
        %v806 = vmax.f32 %v788, 0.0
        %v807 = vmax.f32 %v790, 0.0
        %v808 = vpack.c.bf16 %v793, %v792
        %v809 = vpack.c.bf16 %v795, %v794
        %v810 = vpack.c.bf16 %v797, %v796
        %v811 = vpack.c.bf16 %v799, %v798
        %v812 = vpack.c.bf16 %v801, %v800
        %v813 = vpack.c.bf16 %v803, %v802
        %v814 = vpack.c.bf16 %v805, %v804
        %v815 = vpack.c.bf16 %v807, %v806
        %v816 = vld [vmem:[%s5] sm:$0x1]
        %s817 = sld [smem:[#allocation2]]
        %v818 = vstv %s817
        %819 = vmatpush.bf16.msra.mxu0 %v815
        %820 = vmatpush.bf16.msra.mxu0 %v814
        %821 = vmatpush.bf16.msra.mxu0 %v813
        %822 = vmatpush.bf16.msra.mxu0 %v812
        %823 = vmatpush.bf16.msra.mxu0 %v811
        %824 = vmatpush.bf16.msra.mxu0 %v810
        %825 = vmatpush.bf16.msra.mxu0 %v809
        %826 = vmatpush.bf16.msra.mxu0 %v808
        %827 = vmatmul.bf16.gmra.mxu0 %v816
        %v828 = vpop.f32.mrf.mxu0
        %v829 = vadd.f32 %v818, %v828
        %v830 = vpop.f32.mrf.mxu0
        %831 = vdwg.mxu0
        %832 = vst [vmem:[%s323] sm:$0x1] %v829
        %s833 = sand.u32 %s182, 1
        %s834 = scalar_lea.sflag [#allocation5], %s833
        %s835 = sand.u32 %s182, 1
        %s836 = scalar_lea.vmem [#allocation4], %s835
        // Predicated region
        $region90: #{tpu_custom_call.1} parent=84 // pred_check
          %p837 = pneg %p192
        $region91: #{tpu_custom_call.1} parent=84 // pred_check_branch
          %839 = sbr.rel (%p837) target = $region93
        $region92: #{tpu_custom_call.1} parent=84 // pred_region
          %841 = vsyncadd %s834, 0
          %s842 = scalar_lea.hbm %s7, %s22
          %s844 = sshll.u32 %s836, 4
          %s845 = int_to_ptr.vmem [resolvable:$true] %s844
          %s846 = sshll.u32 %s842, 4
          %s847 = int_to_ptr.hbm [resolvable:$true] %s846
          %849 = dma.vmem_to_hbm [thread:$0]  %s845, 16, %s847, %s834
        $region93: #{tpu_custom_call.1} parent=84 // pred_fallthru
          _
      $region85: #{tpu_custom_call.1} parent=5 // pred_fallthru
        _
      %p850 = scmp.le.s32.totalorder 2, %s17
      // Predicated region
      $region94: #{tpu_custom_call.1} parent=5 // pred_check
        %p851 = pneg %p850
      $region95: #{tpu_custom_call.1} parent=5 // pred_check_branch
        %853 = sbr.rel (%p851) target = $region97
      $region96: #{tpu_custom_call.1} parent=5 // pred_region
        %s854 = ssub.s32 %s17, 2
        // Predicated region
        $region98: #{tpu_custom_call.1} parent=96 // pred_check
          %p855 = pneg %p198
        $region99: #{tpu_custom_call.1} parent=96 // pred_check_branch
          %857 = sbr.rel (%p855) target = $region101
        $region100: #{tpu_custom_call.1} parent=96 // pred_region
          %s858 = sand.u32 %s183, 1
          %s859 = scalar_lea.sflag [#allocation5], %s858
          %s860 = sand.u32 %s183, 1
          %s861 = scalar_lea.vmem [#allocation4], %s860
          %863 = dma.done %s859, 16
        $region101: #{tpu_custom_call.1} parent=96 // pred_fallthru
          _
      $region97: #{tpu_custom_call.1} parent=5 // pred_fallthru
        _
    $region6: #{tpu_custom_call.1} parent=1 // loop_footer
      %s21 = sadd.s32 1, %s17
    $region7: #{tpu_custom_call.1} parent=1 // loop_footer_branch
      %16 = sbr.rel target = $region3
    $region8: #{tpu_custom_call.1} parent=1 // loop_exit
      _
    %864 = vsyncpa [#allocation5], 1
    %s865 = scalar_lea.sflag [#allocation5], 1
    %866 = vsyncpa %s865, 1

</llo_original>
